<compile_context>
chip_gen: v6e
topology: v6e:2x2x1
jax: 0.10.0
libtpu: 0.0.40
codegen_flags: <defaults>
</compile_context>

<pallas_src>
import math

import numpy as np
import jax
import jax.numpy as jnp
from jax.experimental import pallas as pl
from jax.experimental.pallas import tpu as pltpu


_INV_SQRT2 = float(1.0 / math.sqrt(2.0))


def _round_up(x, m):
    return ((x + m - 1) // m) * m


def _exact_gelu_f32(x):
    # nn.GELU() default in PyTorch == exact erf-based GELU (done in f32).
    return 0.5 * x * (1.0 + jax.lax.erf(x * jnp.float32(_INV_SQRT2)))


# ------------------------------- Pallas kernel ------------------------------

def _fused_kernel(node_ref, edge_ref, idx_ref, src_ref,
                  w1n_ref, w1e_ref, w2_ref, b_ref, o_ref):
    """Row tile of: in_proj MLP + indicator-selected row replacement."""
    # in_proj: Linear(2*d_g -> d_pad) -> exact GELU -> Linear(d_pad -> d_pad).
    # cat([node_h, edge_h]) of the reference is realised as two matmuls against
    # the split first-layer weight (no concat pass, no concat buffer).
    h = (jnp.dot(node_ref[...], w1n_ref[...], preferred_element_type=jnp.float32)
         + jnp.dot(edge_ref[...], w1e_ref[...], preferred_element_type=jnp.float32)
         + b_ref[0:1, :])
    h = _exact_gelu_f32(h)
    base = (jnp.dot(h.astype(w2_ref.dtype), w2_ref[...],
                    preferred_element_type=jnp.float32)
            + b_ref[1:2, :])                                         # (tm, d_pad) f32

    # Indicator merge: one one-hot selection matmul against the stacked f32
    # source table [fp_proj(fp_1|fp_2); md_proj(md_1|md_2); embedding rows].
    idx = idx_ref[...]                                               # (tm, 1) i32, -1 = keep
    tm = idx.shape[0]
    n_src = src_ref.shape[0]
    sel = (idx == jax.lax.broadcasted_iota(jnp.int32, (tm, n_src), 1)
           ).astype(jnp.float32)
    repl = jnp.dot(sel, src_ref[...], preferred_element_type=jnp.float32)

    o_ref[...] = jnp.where(idx < 0, base, repl).astype(o_ref.dtype)


# ------------------------------ tiling helpers -------------------------------

def _vmem_bytes(tm, d_g, d_pad, n_src, stream_bytes):
    dbl = 2                                           # double-buffered pipeline slots
    act_in = dbl * (2 * tm * d_g * stream_bytes + tm * 4)      # node + edge + idx
    act_out = dbl * tm * d_pad * 4
    weights = (2 * d_g * d_pad + d_pad * d_pad) * stream_bytes + 2 * d_pad * 4
    src = n_src * d_pad * 4
    return act_in + act_out + dbl * (weights + src)


def _pick_row_tile(n, d_g, d_pad, n_src, stream_bytes):
    # <=512 rows/tile (near the HBM roofline), multiple of 8, and >=2 grid
    # steps whenever n allows it so v7x's two TensorCores both get work.
    tm = max(8, min(512, _round_up(max(1, (n + 1) // 2), 8)))
    # Keep steady-state VMEM comfortably under the v7x scoped default.
    while tm > 8 and _vmem_bytes(tm, d_g, d_pad, n_src, stream_bytes) > 28 * 2**20:
        tm = max(8, _round_up(tm // 2, 8))
    return tm


# ------------------------------ parameters ---------------------------------

def _init_linear(key, d_in, d_out):
    k1, k2 = jax.random.split(key)
    w = jax.random.normal(k1, (d_in, d_out), jnp.float32) * (1.0 / math.sqrt(d_in))
    b = jax.random.normal(k2, (d_out,), jnp.float32) * 0.01
    return w, b


def _init_mlp2(key, d_in, d_out):
    k1, k2 = jax.random.split(key)
    return (*_init_linear(k1, d_in, d_out), *_init_linear(k2, d_out, d_out))


def init_params(key, d_g, d_fp, d_md, ratio_vocab=16, global_vocab=4):
    ks = jax.random.split(key, 5)
    return {
        "in_proj": _init_mlp2(ks[0], 2 * d_g, d_g),
        "fp_proj": _init_mlp2(ks[1], d_fp, d_g),
        "md_proj": _init_mlp2(ks[2], d_md, d_g),
        # `self.embedding` / `self.global_node_emb` are attributes assumed to
        # exist on the module; synthesized here as embedding tables.
        "embedding": jax.random.normal(ks[3], (ratio_vocab, d_g), jnp.float32),
        "global_node_emb": jax.random.normal(ks[4], (global_vocab, d_g), jnp.float32),
    }


def _mlp2_host(x, w1, b1, w2, b2):
    # Same math as the kernel's in_proj (exact erf GELU), used for the tiny
    # O(G)-row fp/md projections that are hoisted out of the per-tile body.
    h = x @ w1 + b1
    h = 0.5 * h * (1.0 + jax.scipy.special.erf(h * _INV_SQRT2))
    return h @ w2 + b2


# ------------------------------ forward pass --------------------------------

def triplet_embedding_copoly(params, node_h, edge_h, fp_1, md_1, fp_2, md_2,
                             ratio, indicators, *, stream_dtype=jnp.float32):
    N, d_g = node_h.shape
    G = fp_1.shape[0]
    d_pad = _round_up(d_g, 128)                       # lane-dense output / weights
    stream_bytes = np.dtype(stream_dtype).itemsize

    # -------- grid-invariant O(G)-row work stays in the wrapper --------------
    fp_out = _mlp2_host(jnp.concatenate([fp_1, fp_2], 0), *params["fp_proj"])  # (2G, d_g)
    md_out = _mlp2_host(jnp.concatenate([md_1, md_2], 0), *params["md_proj"])  # (2G, d_g)
    ridx = ratio.astype(jnp.int32)                                             # .long() truncation
    emb_rows = jnp.concatenate([
        params["embedding"][ridx[:, 0]],          # indicator 3
        params["embedding"][ridx[:, 1]],          # indicator 6
        params["global_node_emb"][ridx[:, 2]],    # indicator 7
    ], axis=0)                                                                  # (3G, d_g)
    src_table = jnp.concatenate([fp_out, md_out, emb_rows], 0)                  # (7G, d_g) f32
    n_src = _round_up(7 * G, 8)
    src_table = jnp.pad(src_table, ((0, n_src - 7 * G), (0, d_pad - d_g)))

    # Per-row index into the stacked source table; -1 = keep in_proj output.
    # Emulates PyTorch boolean-mask assignment: the k-th True row of
    # `indicators == c` receives row k of that class's source.
    ind = indicators.astype(jnp.int32)
    onehot = ind[:, None] == jnp.arange(1, 8, dtype=jnp.int32)[None, :]         # (N, 7)
    rank = jnp.sum(jnp.where(onehot,
                             jnp.cumsum(onehot.astype(jnp.int32), axis=0) - 1,
                             0), axis=1)
    # TODO(synk): PyTorch raises if a class has more masked rows than source
    # rows; here the rank is clamped, silently reusing the last source row.
    rank = jnp.minimum(rank, G - 1)
    base_off = jnp.array([0, 2 * G, 4 * G, G, 3 * G, 5 * G, 6 * G], jnp.int32)
    src_idx = base_off[jnp.clip(ind - 1, 0, 6)] + rank
    is_repl = (ind >= 1) & (ind <= 7)
    src_idx = jnp.where(is_repl, src_idx, -1).astype(jnp.int32)[:, None]        # (N, 1)

    # -------- in_proj weights: split, lane-padded, streamed ------------------
    w1, b1, w2, b2 = params["in_proj"]
    w1n = jnp.pad(w1[:d_g], ((0, 0), (0, d_pad - d_g))).astype(stream_dtype)
    w1e = jnp.pad(w1[d_g:], ((0, 0), (0, d_pad - d_g))).astype(stream_dtype)
    w2p = jnp.pad(w2, ((0, d_pad - d_g), (0, d_pad - d_g))).astype(stream_dtype)
    b_pack = jnp.stack([jnp.pad(b1, (0, d_pad - d_g)),
                        jnp.pad(b2, (0, d_pad - d_g))], 0)                      # (2, d_pad) f32

    node = node_h.astype(stream_dtype)
    edge = edge_h.astype(stream_dtype)

    # -------- row tiling ------------------------------------------------------
    tm = _pick_row_tile(N, d_g, d_pad, n_src, stream_bytes)
    n_pad = _round_up(N, tm)
    if n_pad != N:
        node = jnp.pad(node, ((0, n_pad - N), (0, 0)))
        edge = jnp.pad(edge, ((0, n_pad - N), (0, 0)))
        src_idx = jnp.pad(src_idx, ((0, n_pad - N), (0, 0)), constant_values=-1)
    grid = (n_pad // tm,)

    def row(shape):
        return pl.BlockSpec(shape, lambda i: (i, 0))

    def full(a):
        return pl.BlockSpec(a.shape, lambda i: (0, 0))

    vmem_limit = int(min(48 * 2**20,
                         max(8 * 2**20,
                             2 * _vmem_bytes(tm, d_g, d_pad, n_src, stream_bytes))))

    out = pl.pallas_call(
        _fused_kernel,
        out_shape=jax.ShapeDtypeStruct((n_pad, d_pad), jnp.float32),
        grid=grid,
        in_specs=[row((tm, d_g)), row((tm, d_g)), row((tm, 1)),
                  full(src_table), full(w1n), full(w1e), full(w2p), full(b_pack)],
        out_specs=pl.BlockSpec((tm, d_pad), lambda i: (i, 0)),
        compiler_params=pltpu.CompilerParams(
            dimension_semantics=("parallel",),
            vmem_limit_bytes=vmem_limit),
    )(node, edge, src_idx, src_table, w1n, w1e, w2p, b_pack)

    return out[:N, :d_g]


# ----------------------------- pure-JAX reference ---------------------------

def ref_forward(params, node_h, edge_h, fp_1, md_1, fp_2, md_2, ratio, indicators):
    cat_h = jnp.concatenate([node_h, edge_h], axis=-1)
    th = np.array(_mlp2_host(cat_h, *params["in_proj"]))
    ind = np.array(indicators)
    ridx = np.array(ratio).astype(np.int64)
    th[ind == 1] = np.array(_mlp2_host(fp_1, *params["fp_proj"]))
    th[ind == 2] = np.array(_mlp2_host(md_1, *params["md_proj"]))
    th[ind == 3] = np.array(params["embedding"])[ridx[:, 0]]
    th[ind == 4] = np.array(_mlp2_host(fp_2, *params["fp_proj"]))
    th[ind == 5] = np.array(_mlp2_host(md_2, *params["md_proj"]))
    th[ind == 6] = np.array(params["embedding"])[ridx[:, 1]]
    th[ind == 7] = np.array(params["global_node_emb"])[ridx[:, 2]]
    return th


# ------------------------------------ main -----------------------------------

if __name__ == "__main__":
    d_g, d_fp, d_md = 32, 48, 16
    G = 2          # number of (co)polymer graphs -> rows of fp/md/ratio
    N = 32         # total triplet rows

    key = jax.random.PRNGKey(0)
    kp, *ks = jax.random.split(key, 8)
    params = init_params(kp, d_g, d_fp, d_md)

    node_h = jax.random.normal(ks[0], (N, d_g), jnp.float32)
    edge_h = jax.random.normal(ks[1], (N, d_g), jnp.float32)
    fp_1 = jax.random.normal(ks[2], (G, d_fp), jnp.float32)
    md_1 = jax.random.normal(ks[3], (G, d_md), jnp.float32)
    fp_2 = jax.random.normal(ks[4], (G, d_fp), jnp.float32)
    md_2 = jax.random.normal(ks[5], (G, d_md), jnp.float32)
    ratio = jnp.array([[3.0, 7.0, 0.0],
                       [5.0, 2.0, 1.0]], jnp.float32)            # (G, 3)

    # indicators: one row of each special type (1..7) per graph, rest are 0.
    ind_np = np.zeros((N,), np.int32)
    ind_np[18:25] = np.arange(1, 8)
    ind_np[25:32] = np.arange(1, 8)
    indicators = jnp.array(ind_np)

    ref = ref_forward(params, node_h, edge_h, fp_1, md_1, fp_2, md_2,
                      ratio, indicators)

    # f32 streaming: exact parity with the PyTorch module.
    out = triplet_embedding_copoly(params, node_h, edge_h, fp_1, md_1,
                                   fp_2, md_2, ratio, indicators)
    out = jax.block_until_ready(out)
    np.testing.assert_allclose(np.array(out), ref, rtol=1e-4, atol=1e-4)

    # bf16 streaming (halves HBM traffic; embedding / replaced rows stay f32-exact).
    out_bf16 = triplet_embedding_copoly(params, node_h, edge_h, fp_1, md_1,
                                        fp_2, md_2, ratio, indicators,
                                        stream_dtype=jnp.bfloat16)
    out_bf16 = jax.block_until_ready(out_bf16)
    np.testing.assert_allclose(np.array(out_bf16), ref, rtol=5e-2, atol=5e-2)

    print("KERNEL_OK")
</pallas_src>

<mosaic_0001>
module attributes {stable_mosaic.version = 11 : i64} {
  func.func @_fused_kernel(%arg0: i32, %arg1: memref<16x32xf32, #tpu.memory_space<vmem>>, %arg2: memref<16x32xf32, #tpu.memory_space<vmem>>, %arg3: memref<16x1xi32, #tpu.memory_space<vmem>>, %arg4: memref<16x128xf32, #tpu.memory_space<vmem>>, %arg5: memref<32x128xf32, #tpu.memory_space<vmem>>, %arg6: memref<32x128xf32, #tpu.memory_space<vmem>>, %arg7: memref<128x128xf32, #tpu.memory_space<vmem>>, %arg8: memref<2x128xf32, #tpu.memory_space<vmem>>, %arg9: memref<16x128xf32, #tpu.memory_space<vmem>>) attributes {dimension_semantics = [#tpu.dimension_semantics<parallel>], iteration_bounds = array<i64: 2>, scalar_prefetch = 0 : i64, scratch_operands = 0 : i64, tpu.core_type = #tpu.core_type<tc>, window_params = [{transform_indices = @transform_0, window_bounds = array<i64: 16, 32>}, {transform_indices = @transform_1, window_bounds = array<i64: 16, 32>}, {transform_indices = @transform_2, window_bounds = array<i64: 16, 1>}, {pipeline_mode = #tpu.pipeline_mode<synchronous>, transform_indices = @transform_3, window_bounds = array<i64: 16, 128>}, {pipeline_mode = #tpu.pipeline_mode<synchronous>, transform_indices = @transform_4, window_bounds = array<i64: 32, 128>}, {pipeline_mode = #tpu.pipeline_mode<synchronous>, transform_indices = @transform_5, window_bounds = array<i64: 32, 128>}, {pipeline_mode = #tpu.pipeline_mode<synchronous>, transform_indices = @transform_6, window_bounds = array<i64: 128, 128>}, {pipeline_mode = #tpu.pipeline_mode<synchronous>, transform_indices = @transform_7, window_bounds = array<i64: 2, 128>}, {transform_indices = @transform_8, window_bounds = array<i64: 16, 128>}]} {
    %c0 = arith.constant 0 : index
    %c0_0 = arith.constant 0 : index
    %0 = vector.load %arg1[%c0, %c0_0] : memref<16x32xf32, #tpu.memory_space<vmem>>, vector<16x32xf32>
    %c0_1 = arith.constant 0 : index
    %c0_2 = arith.constant 0 : index
    %1 = vector.load %arg5[%c0_1, %c0_2] : memref<32x128xf32, #tpu.memory_space<vmem>>, vector<32x128xf32>
    %cst = arith.constant dense<0.000000e+00> : vector<16x128xf32>
    %2 = tpu.matmul %0, %1, %cst {dimension_numbers = #tpu.dot_dimension_numbers<[1], [0], [0], [1], [0, 0, 1, 1], [], []>} : vector<16x32xf32>, vector<32x128xf32>, vector<16x128xf32> -> vector<16x128xf32>
    %c0_3 = arith.constant 0 : index
    %c0_4 = arith.constant 0 : index
    %3 = vector.load %arg2[%c0_3, %c0_4] : memref<16x32xf32, #tpu.memory_space<vmem>>, vector<16x32xf32>
    %c0_5 = arith.constant 0 : index
    %c0_6 = arith.constant 0 : index
    %4 = vector.load %arg6[%c0_5, %c0_6] : memref<32x128xf32, #tpu.memory_space<vmem>>, vector<32x128xf32>
    %cst_7 = arith.constant dense<0.000000e+00> : vector<16x128xf32>
    %5 = tpu.matmul %3, %4, %cst_7 {dimension_numbers = #tpu.dot_dimension_numbers<[1], [0], [0], [1], [0, 0, 1, 1], [], []>} : vector<16x32xf32>, vector<32x128xf32>, vector<16x128xf32> -> vector<16x128xf32>
    %6 = arith.addf %2, %5 : vector<16x128xf32>
    %c0_8 = arith.constant 0 : index
    %c0_9 = arith.constant 0 : index
    %7 = vector.load %arg8[%c0_8, %c0_9] : memref<2x128xf32, #tpu.memory_space<vmem>>, vector<1x128xf32>
    %8 = vector.broadcast %7 : vector<1x128xf32> to vector<16x128xf32>
    %9 = arith.addf %6, %8 : vector<16x128xf32>
    %cst_10 = arith.constant 5.000000e-01 : f32
    %10 = vector.broadcast %cst_10 : f32 to vector<16x128xf32>
    %11 = arith.mulf %10, %9 : vector<16x128xf32>
    %cst_11 = arith.constant 0.707106769 : f32
    %12 = vector.broadcast %cst_11 : f32 to vector<16x128xf32>
    %13 = arith.mulf %9, %12 : vector<16x128xf32>
    %14 = math.erf %13 : vector<16x128xf32>
    %cst_12 = arith.constant 1.000000e+00 : f32
    %15 = vector.broadcast %cst_12 : f32 to vector<16x128xf32>
    %16 = arith.addf %15, %14 : vector<16x128xf32>
    %17 = arith.mulf %11, %16 : vector<16x128xf32>
    %c0_13 = arith.constant 0 : index
    %c0_14 = arith.constant 0 : index
    %18 = vector.load %arg7[%c0_13, %c0_14] : memref<128x128xf32, #tpu.memory_space<vmem>>, vector<128x128xf32>
    %cst_15 = arith.constant dense<0.000000e+00> : vector<16x128xf32>
    %19 = tpu.matmul %17, %18, %cst_15 {dimension_numbers = #tpu.dot_dimension_numbers<[1], [0], [0], [1], [0, 0, 1, 1], [], []>} : vector<16x128xf32>, vector<128x128xf32>, vector<16x128xf32> -> vector<16x128xf32>
    %c1 = arith.constant 1 : index
    %c0_16 = arith.constant 0 : index
    %20 = vector.load %arg8[%c1, %c0_16] : memref<2x128xf32, #tpu.memory_space<vmem>>, vector<1x128xf32>
    %21 = vector.broadcast %20 : vector<1x128xf32> to vector<16x128xf32>
    %22 = arith.addf %19, %21 : vector<16x128xf32>
    %c0_17 = arith.constant 0 : index
    %c0_18 = arith.constant 0 : index
    %23 = vector.load %arg3[%c0_17, %c0_18] : memref<16x1xi32, #tpu.memory_space<vmem>>, vector<16x1xi32>
    %24 = tpu.iota {dimensions = array<i32: 1>} : vector<16x16xi32>
    %25 = vector.broadcast %23 : vector<16x1xi32> to vector<16x16xi32>
    %26 = arith.cmpi eq, %25, %24 : vector<16x16xi32>
    %27 = arith.extui %26 : vector<16x16xi1> to vector<16x16xi32>
    %28 = arith.sitofp %27 : vector<16x16xi32> to vector<16x16xf32>
    %c0_19 = arith.constant 0 : index
    %c0_20 = arith.constant 0 : index
    %29 = vector.load %arg4[%c0_19, %c0_20] : memref<16x128xf32, #tpu.memory_space<vmem>>, vector<16x128xf32>
    %cst_21 = arith.constant dense<0.000000e+00> : vector<16x128xf32>
    %30 = tpu.matmul %28, %29, %cst_21 {dimension_numbers = #tpu.dot_dimension_numbers<[1], [0], [0], [1], [0, 0, 1, 1], [], []>} : vector<16x16xf32>, vector<16x128xf32>, vector<16x128xf32> -> vector<16x128xf32>
    %c0_i32 = arith.constant 0 : i32
    %31 = vector.broadcast %c0_i32 : i32 to vector<16x1xi32>
    %32 = arith.cmpi slt, %23, %31 : vector<16x1xi32>
    %33 = vector.shape_cast %32 : vector<16x1xi1> to vector<16x1xi1>
    %34 = vector.broadcast %33 : vector<16x1xi1> to vector<16x128xi1>
    %35 = arith.select %34, %22, %30 : vector<16x128xi1>, vector<16x128xf32>
    %c0_22 = arith.constant 0 : index
    %c0_23 = arith.constant 0 : index
    %36 = vector.load %arg9[%c0_22, %c0_23] : memref<16x128xf32, #tpu.memory_space<vmem>>, vector<16x128xf32>
    tpu.vector_store %arg9[%c0_22, %c0_23], %35 {strides = array<i32>} : memref<16x128xf32, #tpu.memory_space<vmem>>, vector<16x128xf32>,
    return
  }
  func.func @transform_0(%arg0: i32) -> (i32, i32) {
    %c0_i32 = arith.constant 0 : i32
    %c0_i32_0 = arith.constant 0 : i32
    return %arg0, %c0_i32 : i32, i32
  }
  func.func @transform_1(%arg0: i32) -> (i32, i32) {
    %c0_i32 = arith.constant 0 : i32
    %c0_i32_0 = arith.constant 0 : i32
    return %arg0, %c0_i32 : i32, i32
  }
  func.func @transform_2(%arg0: i32) -> (i32, i32) {
    %c0_i32 = arith.constant 0 : i32
    %c0_i32_0 = arith.constant 0 : i32
    return %arg0, %c0_i32 : i32, i32
  }
  func.func @transform_3(%arg0: i32) -> (i32, i32) {
    %c0_i32 = arith.constant 0 : i32
    %c0_i32_0 = arith.constant 0 : i32
    %c0_i32_1 = arith.constant 0 : i32
    return %c0_i32, %c0_i32_0 : i32, i32
  }
  func.func @transform_4(%arg0: i32) -> (i32, i32) {
    %c0_i32 = arith.constant 0 : i32
    %c0_i32_0 = arith.constant 0 : i32
    %c0_i32_1 = arith.constant 0 : i32
    return %c0_i32, %c0_i32_0 : i32, i32
  }
  func.func @transform_5(%arg0: i32) -> (i32, i32) {
    %c0_i32 = arith.constant 0 : i32
    %c0_i32_0 = arith.constant 0 : i32
    %c0_i32_1 = arith.constant 0 : i32
    return %c0_i32, %c0_i32_0 : i32, i32
  }
  func.func @transform_6(%arg0: i32) -> (i32, i32) {
    %c0_i32 = arith.constant 0 : i32
    %c0_i32_0 = arith.constant 0 : i32
    %c0_i32_1 = arith.constant 0 : i32
    return %c0_i32, %c0_i32_0 : i32, i32
  }
  func.func @transform_7(%arg0: i32) -> (i32, i32) {
    %c0_i32 = arith.constant 0 : i32
    %c0_i32_0 = arith.constant 0 : i32
    %c0_i32_1 = arith.constant 0 : i32
    return %c0_i32, %c0_i32_0 : i32, i32
  }
  func.func @transform_8(%arg0: i32) -> (i32, i32) {
    %c0_i32 = arith.constant 0 : i32
    %c0_i32_0 = arith.constant 0 : i32
    return %arg0, %c0_i32 : i32, i32
  }
}

</mosaic_0001>

<llo_original>
// kernel: tpu_custom_call.1
$region0: #{tpu_custom_call.1}
  #allocation0 [shape = 'u32[]', space=smem, size = 0x4, offset = 0x4, fixed_abs, tag = 'smem constant byte address 0x4 - core index']
  #allocation1 [shape = 'u32[144,128]{1,0:T(1,128)}', space=vmem, size = 0x12000, scoped, tag = 'internal scratch']
  %s0 = inlined_call_operand.vmem [shape: f32[32,32], index: 0, kind: input, shape index: {}]
  %s1 = inlined_call_operand.hbm [shape: f32[32,32], index: 1, kind: input, shape index: {}]
  %s2 = inlined_call_operand.vmem [shape: s32[32,1], index: 2, kind: input, shape index: {}]
  %s3 = inlined_call_operand.hbm [shape: f32[16,128], index: 3, kind: input, shape index: {}]
  %s4 = inlined_call_operand.hbm [shape: f32[32,128], index: 4, kind: input, shape index: {}]
  %s5 = inlined_call_operand.hbm [shape: f32[32,128], index: 5, kind: input, shape index: {}]
  %s6 = inlined_call_operand.hbm [shape: f32[128,128], index: 6, kind: input, shape index: {}]
  %s7 = inlined_call_operand.vmem [shape: f32[2,128], index: 7, kind: input, shape index: {}]
  %s8 = inlined_call_operand.hbm [shape: f32[32,128], index: 8, kind: output, shape index: {}]
  %s9 = sld [smem:[#allocation0]]
  $region85: #{tpu_custom_call.1} parent=0
    _
  %s11 = ssub.s32 1, %s9
  %s12 = scalar_select 0, %s11, %s9
  $region1: #{tpu_custom_call.1} parent=0
    #allocation2 [shape = 'u8[16384]{0}', space=vmem, size = 0x4000, scoped, tag = 'input window, operand 1']
    #allocation3 [shape = 's32[2]{0}', space=sflag, size = 0x8, scoped, tag = 'scoped memory for tpu_custom_call.1']
    #allocation4 [shape = 's32[2]{0}', space=sflag, size = 0x8, scoped, tag = 'scoped memory for tpu_custom_call.1']
    #allocation5 [shape = 'u8[8192]{0}', space=vmem, size = 0x2000, scoped, tag = 'input window, operand 3, single buffered']
    #allocation6 [shape = 's32[1]{0}', space=sflag, size = 0x4, scoped, tag = 'scoped memory for tpu_custom_call.1']
    #allocation7 [shape = 'u8[16384]{0}', space=vmem, size = 0x4000, scoped, tag = 'input window, operand 4, single buffered']
    #allocation8 [shape = 'u8[16384]{0}', space=vmem, size = 0x4000, scoped, tag = 'input window, operand 5, single buffered']
    #allocation9 [shape = 's32[1]{0}', space=sflag, size = 0x4, scoped, tag = 'scoped memory for tpu_custom_call.1']
    #allocation10 [shape = 'u8[65536]{0}', space=vmem, size = 0x10000, scoped, tag = 'input window, operand 6, single buffered']
    #allocation11 [shape = 'u8[16384]{0}', space=vmem, size = 0x4000, scoped, tag = 'output window, operand 0']
    %13 = vsyncpa [#allocation3], 0
    %s14 = scalar_lea.sflag [#allocation3], 1
    %15 = vsyncpa %s14, 0
    %16 = vsyncpa [#allocation6], 0
    %17 = vsyncpa [#allocation9], 0
    %18 = vsyncpa [#allocation4], 0
    %s19 = scalar_lea.sflag [#allocation4], 1
    %20 = vsyncpa %s19, 0
    loop: start=0, step=1, limit=4
    $region2: #{tpu_custom_call.1} parent=1 // loop_pre_header
      _
    $region3: #{tpu_custom_call.1} parent=1 // loop_header
      %s22 = sphi 0, %s26
      %p23 = scmp.ge.s32.totalorder %s22, 4
      %s32 = sphi 0, %s34
      %s35 = sphi 0, %s32
      %s36 = sphi 0, %s35
      %s52 = sphi 0, %s36
      %s58 = sphi 0, %s60
      %s61 = sphi 0, %s58
      %s62 = sphi 0, %s61
      %s78 = sphi 0, %s62
      %s84 = sphi 0, %s86
      %s87 = sphi 0, %s84
      %s88 = sphi 0, %s87
      %s104 = sphi 0, %s88
      %s108 = sphi 0, %s108
      %s110 = sphi 0, %s108
      %s111 = sphi 0, %s110
      %s125 = sphi 0, %s111
      %s129 = sphi 0, %s129
      %s131 = sphi 0, %s129
      %s132 = sphi 0, %s131
      %s146 = sphi 0, %s132
      %s150 = sphi 0, %s150
      %s152 = sphi 0, %s150
      %s153 = sphi 0, %s152
      %s167 = sphi 0, %s153
      %s171 = sphi 0, %s171
      %s173 = sphi 0, %s171
      %s174 = sphi 0, %s173
      %s188 = sphi 0, %s174
      %s192 = sphi 0, %s192
      %s194 = sphi 0, %s192
      %s195 = sphi 0, %s194
      %s209 = sphi 0, %s195
      %s215 = sphi 0, %s217
      %s218 = sphi 0, %s215
      %s219 = sphi 0, %s218
      %s235 = sphi 0, %s219
    $region4: #{tpu_custom_call.1} parent=1 // loop_header_branch
      %25 = sbr.rel (%p23) target = $region8
    $region5: #{tpu_custom_call.1} parent=1 // loop_body
      %s27 = ssub.s32 %s22, 1
      %s28 = ssub.s32 %s22, 2
      %s29 = sadd.s32 %s22, 1
      %s30 = ssub.s32 %s22, %s29
      %p31 = scmp.eq.s32.totalorder %s30, 0
      %s33 = sadd.s32 %s32, 1
      %s34 = scalar_select %p31, %s32, %s33
      %p37 = pneg %p31
      %p38 = scmp.eq.s32.totalorder %s22, 1
      %p39 = por %p37, %p38
      %p40 = scmp.ne.s32.totalorder %s32, %s35
      %p41 = scmp.eq.s32.totalorder %s22, 0
      %p42 = por %p40, %p41
      %p43 = scmp.ne.s32.totalorder %s32, %s35
      %p44 = scmp.eq.s32.totalorder %s27, 1
      %p45 = por %p43, %p44
      %p46 = scmp.ne.s32.totalorder %s35, %s36
      %p47 = scmp.eq.s32.totalorder %s27, 0
      %p48 = por %p46, %p47
      %p49 = scmp.ne.s32.totalorder %s35, %s36
      %p50 = scmp.eq.s32.totalorder %s28, 1
      %p51 = por %p49, %p50
      %p53 = scmp.ne.s32.totalorder %s36, %s52
      %p54 = scmp.eq.s32.totalorder %s28, 0
      %p55 = por %p53, %p54
      %s56 = ssub.s32 %s22, %s29
      %p57 = scmp.eq.s32.totalorder %s56, 0
      %s59 = sadd.s32 %s58, 1
      %s60 = scalar_select %p57, %s58, %s59
      %p63 = pneg %p57
      %p64 = scmp.eq.s32.totalorder %s22, 1
      %p65 = por %p63, %p64
      %p66 = scmp.ne.s32.totalorder %s58, %s61
      %p67 = scmp.eq.s32.totalorder %s22, 0
      %p68 = por %p66, %p67
      %p69 = scmp.ne.s32.totalorder %s58, %s61
      %p70 = scmp.eq.s32.totalorder %s27, 1
      %p71 = por %p69, %p70
      %p72 = scmp.ne.s32.totalorder %s61, %s62
      %p73 = scmp.eq.s32.totalorder %s27, 0
      %p74 = por %p72, %p73
      %p75 = scmp.ne.s32.totalorder %s61, %s62
      %p76 = scmp.eq.s32.totalorder %s28, 1
      %p77 = por %p75, %p76
      %p79 = scmp.ne.s32.totalorder %s62, %s78
      %p80 = scmp.eq.s32.totalorder %s28, 0
      %p81 = por %p79, %p80
      %s82 = ssub.s32 %s22, %s29
      %p83 = scmp.eq.s32.totalorder %s82, 0
      %s85 = sadd.s32 %s84, 1
      %s86 = scalar_select %p83, %s84, %s85
      %p89 = pneg %p83
      %p90 = scmp.eq.s32.totalorder %s22, 1
      %p91 = por %p89, %p90
      %p92 = scmp.ne.s32.totalorder %s84, %s87
      %p93 = scmp.eq.s32.totalorder %s22, 0
      %p94 = por %p92, %p93
      %p95 = scmp.ne.s32.totalorder %s84, %s87
      %p96 = scmp.eq.s32.totalorder %s27, 1
      %p97 = por %p95, %p96
      %p98 = scmp.ne.s32.totalorder %s87, %s88
      %p99 = scmp.eq.s32.totalorder %s27, 0
      %p100 = por %p98, %p99
      %p101 = scmp.ne.s32.totalorder %s87, %s88
      %p102 = scmp.eq.s32.totalorder %s28, 1
      %p103 = por %p101, %p102
      %p105 = scmp.ne.s32.totalorder %s88, %s104
      %p106 = scmp.eq.s32.totalorder %s28, 0
      %p107 = por %p105, %p106
      %s109 = sadd.s32 %s108, 1
      %p112 = scmp.eq.s32.totalorder %s22, 1
      %p113 = scmp.ne.s32.totalorder %s108, %s110
      %p114 = scmp.eq.s32.totalorder %s22, 0
      %p115 = por %p113, %p114
      %p116 = scmp.ne.s32.totalorder %s108, %s110
      %p117 = scmp.eq.s32.totalorder %s27, 1
      %p118 = por %p116, %p117
      %p119 = scmp.ne.s32.totalorder %s110, %s111
      %p120 = scmp.eq.s32.totalorder %s27, 0
      %p121 = por %p119, %p120
      %p122 = scmp.ne.s32.totalorder %s110, %s111
      %p123 = scmp.eq.s32.totalorder %s28, 1
      %p124 = por %p122, %p123
      %p126 = scmp.ne.s32.totalorder %s111, %s125
      %p127 = scmp.eq.s32.totalorder %s28, 0
      %p128 = por %p126, %p127
      %s130 = sadd.s32 %s129, 1
      %p133 = scmp.eq.s32.totalorder %s22, 1
      %p134 = scmp.ne.s32.totalorder %s129, %s131
      %p135 = scmp.eq.s32.totalorder %s22, 0
      %p136 = por %p134, %p135
      %p137 = scmp.ne.s32.totalorder %s129, %s131
      %p138 = scmp.eq.s32.totalorder %s27, 1
      %p139 = por %p137, %p138
      %p140 = scmp.ne.s32.totalorder %s131, %s132
      %p141 = scmp.eq.s32.totalorder %s27, 0
      %p142 = por %p140, %p141
      %p143 = scmp.ne.s32.totalorder %s131, %s132
      %p144 = scmp.eq.s32.totalorder %s28, 1
      %p145 = por %p143, %p144
      %p147 = scmp.ne.s32.totalorder %s132, %s146
      %p148 = scmp.eq.s32.totalorder %s28, 0
      %p149 = por %p147, %p148
      %s151 = sadd.s32 %s150, 1
      %p154 = scmp.eq.s32.totalorder %s22, 1
      %p155 = scmp.ne.s32.totalorder %s150, %s152
      %p156 = scmp.eq.s32.totalorder %s22, 0
      %p157 = por %p155, %p156
      %p158 = scmp.ne.s32.totalorder %s150, %s152
      %p159 = scmp.eq.s32.totalorder %s27, 1
      %p160 = por %p158, %p159
      %p161 = scmp.ne.s32.totalorder %s152, %s153
      %p162 = scmp.eq.s32.totalorder %s27, 0
      %p163 = por %p161, %p162
      %p164 = scmp.ne.s32.totalorder %s152, %s153
      %p165 = scmp.eq.s32.totalorder %s28, 1
      %p166 = por %p164, %p165
      %p168 = scmp.ne.s32.totalorder %s153, %s167
      %p169 = scmp.eq.s32.totalorder %s28, 0
      %p170 = por %p168, %p169
      %s172 = sadd.s32 %s171, 1
      %p175 = scmp.eq.s32.totalorder %s22, 1
      %p176 = scmp.ne.s32.totalorder %s171, %s173
      %p177 = scmp.eq.s32.totalorder %s22, 0
      %p178 = por %p176, %p177
      %p179 = scmp.ne.s32.totalorder %s171, %s173
      %p180 = scmp.eq.s32.totalorder %s27, 1
      %p181 = por %p179, %p180
      %p182 = scmp.ne.s32.totalorder %s173, %s174
      %p183 = scmp.eq.s32.totalorder %s27, 0
      %p184 = por %p182, %p183
      %p185 = scmp.ne.s32.totalorder %s173, %s174
      %p186 = scmp.eq.s32.totalorder %s28, 1
      %p187 = por %p185, %p186
      %p189 = scmp.ne.s32.totalorder %s174, %s188
      %p190 = scmp.eq.s32.totalorder %s28, 0
      %p191 = por %p189, %p190
      %s193 = sadd.s32 %s192, 1
      %p196 = scmp.eq.s32.totalorder %s22, 1
      %p197 = scmp.ne.s32.totalorder %s192, %s194
      %p198 = scmp.eq.s32.totalorder %s22, 0
      %p199 = por %p197, %p198
      %p200 = scmp.ne.s32.totalorder %s192, %s194
      %p201 = scmp.eq.s32.totalorder %s27, 1
      %p202 = por %p200, %p201
      %p203 = scmp.ne.s32.totalorder %s194, %s195
      %p204 = scmp.eq.s32.totalorder %s27, 0
      %p205 = por %p203, %p204
      %p206 = scmp.ne.s32.totalorder %s194, %s195
      %p207 = scmp.eq.s32.totalorder %s28, 1
      %p208 = por %p206, %p207
      %p210 = scmp.ne.s32.totalorder %s195, %s209
      %p211 = scmp.eq.s32.totalorder %s28, 0
      %p212 = por %p210, %p211
      %s213 = ssub.s32 %s22, %s29
      %p214 = scmp.eq.s32.totalorder %s213, 0
      %s216 = sadd.s32 %s215, 1
      %s217 = scalar_select %p214, %s215, %s216
      %p220 = pneg %p214
      %p221 = scmp.eq.s32.totalorder %s22, 1
      %p222 = por %p220, %p221
      %p223 = scmp.ne.s32.totalorder %s215, %s218
      %p224 = scmp.eq.s32.totalorder %s22, 0
      %p225 = por %p223, %p224
      %p226 = scmp.ne.s32.totalorder %s215, %s218
      %p227 = scmp.eq.s32.totalorder %s27, 1
      %p228 = por %p226, %p227
      %p229 = scmp.ne.s32.totalorder %s218, %s219
      %p230 = scmp.eq.s32.totalorder %s27, 0
      %p231 = por %p229, %p230
      %p232 = scmp.ne.s32.totalorder %s218, %s219
      %p233 = scmp.eq.s32.totalorder %s28, 1
      %p234 = por %p232, %p233
      %p236 = scmp.ne.s32.totalorder %s219, %s235
      %p237 = scmp.eq.s32.totalorder %s28, 0
      %p238 = por %p236, %p237
      %p239 = scmp.le.s32.totalorder 1, %s22
      %p240 = scmp.lt.s32.totalorder %s22, 3
      %p241 = pnand %p239, %p240
      %p242 = pneg %p241
      // Predicated region
      $region9: #{tpu_custom_call.1} parent=5 // pred_check
        _
      $region10: #{tpu_custom_call.1} parent=5 // pred_check_branch
        %244 = sbr.rel (%p241) target = $region12
      $region11: #{tpu_custom_call.1} parent=5 // pred_region
        %s245 = ssub.s32 %s22, 1
        // Predicated region
        $region13: #{tpu_custom_call.1} parent=11 // pred_check
          %p246 = pneg %p121
        $region14: #{tpu_custom_call.1} parent=11 // pred_check_branch
          %248 = sbr.rel (%p246) target = $region16
        $region15: #{tpu_custom_call.1} parent=11 // pred_region
          %s250 = ssub.s32 256, 256
          %251 = vsyncadd [#allocation6], %s250
          %s252 = sshll.u32 [#allocation5], 4
          %s253 = int_to_ptr.vmem [resolvable:$true] %s252
          %258 = dma.hbm_to_vmem [thread:$0]  %s3, 256, %s253, [#allocation6], 128, 128, 8
        $region16: #{tpu_custom_call.1} parent=11 // pred_fallthru
          _
        // Predicated region
        $region17: #{tpu_custom_call.1} parent=11 // pred_check
          %p259 = pneg %p142
        $region18: #{tpu_custom_call.1} parent=11 // pred_check_branch
          %261 = sbr.rel (%p259) target = $region20
        $region19: #{tpu_custom_call.1} parent=11 // pred_region
          %s263 = ssub.s32 512, 512
          %264 = vsyncadd [#allocation6], %s263
          %s265 = sshll.u32 [#allocation7], 4
          %s266 = int_to_ptr.vmem [resolvable:$true] %s265
          %271 = dma.hbm_to_vmem [thread:$0]  %s4, 512, %s266, [#allocation6], 128, 128, 8
        $region20: #{tpu_custom_call.1} parent=11 // pred_fallthru
          _
        // Predicated region
        $region21: #{tpu_custom_call.1} parent=11 // pred_check
          %p272 = pneg %p163
        $region22: #{tpu_custom_call.1} parent=11 // pred_check_branch
          %274 = sbr.rel (%p272) target = $region24
        $region23: #{tpu_custom_call.1} parent=11 // pred_region
          %s276 = ssub.s32 512, 512
          %277 = vsyncadd [#allocation9], %s276
          %s278 = sshll.u32 [#allocation8], 4
          %s279 = int_to_ptr.vmem [resolvable:$true] %s278
          %284 = dma.hbm_to_vmem [thread:$0]  %s5, 512, %s279, [#allocation9], 128, 128, 8
        $region24: #{tpu_custom_call.1} parent=11 // pred_fallthru
          _
        // Predicated region
        $region25: #{tpu_custom_call.1} parent=11 // pred_check
          %p285 = pneg %p184
        $region26: #{tpu_custom_call.1} parent=11 // pred_check_branch
          %287 = sbr.rel (%p285) target = $region28
        $region27: #{tpu_custom_call.1} parent=11 // pred_region
          %s289 = ssub.s32 2048, 2048
          %290 = vsyncadd [#allocation9], %s289
          %s291 = sshll.u32 [#allocation10], 4
          %s292 = int_to_ptr.vmem [resolvable:$true] %s291
          %297 = dma.hbm_to_vmem [thread:$0]  %s6, 2048, %s292, [#allocation9], 128, 128, 8
        $region28: #{tpu_custom_call.1} parent=11 // pred_fallthru
          _
        // Predicated region
        $region29: #{tpu_custom_call.1} parent=11 // pred_check
          %p298 = pneg %p205
        $region30: #{tpu_custom_call.1} parent=11 // pred_check_branch
          %300 = sbr.rel (%p298) target = $region32
        $region31: #{tpu_custom_call.1} parent=11 // pred_region
          _
        $region32: #{tpu_custom_call.1} parent=11 // pred_fallthru
          _
      $region12: #{tpu_custom_call.1} parent=5 // pred_fallthru
        _
      %p301 = scmp.lt.s32.totalorder %s22, 2
      // Predicated region
      $region33: #{tpu_custom_call.1} parent=5 // pred_check
        %p302 = pneg %p301
      $region34: #{tpu_custom_call.1} parent=5 // pred_check_branch
        %304 = sbr.rel (%p302) target = $region36
      $region35: #{tpu_custom_call.1} parent=5 // pred_region
        // Predicated region
        $region37: #{tpu_custom_call.1} parent=35 // pred_check
          %p305 = pneg %p42
        $region38: #{tpu_custom_call.1} parent=35 // pred_check_branch
          %307 = sbr.rel (%p305) target = $region40
        $region39: #{tpu_custom_call.1} parent=35 // pred_region
          %s308 = smul.u32 2, %s22
          %p309 = scmp.lt.s32.totalorder %s308, 3
          %s310 = scalar_select %p309, %s308, 3
          %s311 = smul.addr %s310, 8
          %s312 = scalar_lea.vmem %s0, %s311
          %s313 = smul.u32 2, %s22
        $region40: #{tpu_custom_call.1} parent=35 // pred_fallthru
          _
        // Predicated region
        $region41: #{tpu_custom_call.1} parent=35 // pred_check
          %p314 = pneg %p68
        $region42: #{tpu_custom_call.1} parent=35 // pred_check_branch
          %316 = sbr.rel (%p314) target = $region44
        $region43: #{tpu_custom_call.1} parent=35 // pred_region
          %s317 = sand.u32 %s58, 1
          %s318 = scalar_lea.sflag [#allocation3], %s317
          %s319 = sand.u32 %s58, 1
          %s320 = smul.addr %s319, 16
          %s321 = scalar_lea.vmem [#allocation2], %s320
          %s322 = smul.u32 2, %s22
          %s324 = ssub.s32 256, 256
          %325 = vsyncadd %s318, %s324
          %s326 = smul.addr %s322, 128
          %s327 = scalar_lea.hbm %s1, %s326
          %s328 = sshll.u32 %s321, 4
          %s329 = int_to_ptr.vmem [resolvable:$true] %s328
          %334 = dma.hbm_to_vmem [thread:$0]  %s327, 256, %s329, %s318, 128, 128, 8
        $region44: #{tpu_custom_call.1} parent=35 // pred_fallthru
          _
        // Predicated region
        $region45: #{tpu_custom_call.1} parent=35 // pred_check
          %p335 = pneg %p94
        $region46: #{tpu_custom_call.1} parent=35 // pred_check_branch
          %337 = sbr.rel (%p335) target = $region48
        $region47: #{tpu_custom_call.1} parent=35 // pred_region
          %s338 = smul.u32 2, %s22
          %p339 = scmp.lt.s32.totalorder %s338, 3
          %s340 = scalar_select %p339, %s338, 3
          %s341 = smul.addr %s340, 8
          %s342 = scalar_lea.vmem %s2, %s341
          %s343 = smul.u32 2, %s22
        $region48: #{tpu_custom_call.1} parent=35 // pred_fallthru
          _
      $region36: #{tpu_custom_call.1} parent=5 // pred_fallthru
        _
      %p344 = scmp.le.s32.totalorder 1, %s22
      %p345 = scmp.lt.s32.totalorder %s22, 3
      %p346 = pnand %p344, %p345
      %p347 = pneg %p346
      // Predicated region
      $region49: #{tpu_custom_call.1} parent=5 // pred_check
        _
      $region50: #{tpu_custom_call.1} parent=5 // pred_check_branch
        %349 = sbr.rel (%p346) target = $region52
      $region51: #{tpu_custom_call.1} parent=5 // pred_region
        %s350 = ssub.s32 %s22, 1
        %s351 = sand.u32 %s61, 1
        %s352 = scalar_lea.sflag [#allocation3], %s351
        %s353 = sand.u32 %s61, 1
        %s354 = smul.addr %s353, 16
        %s355 = scalar_lea.vmem [#allocation2], %s354
        // Predicated region
        $region53: #{tpu_custom_call.1} parent=51 // pred_check
          %p356 = pneg %p74
        $region54: #{tpu_custom_call.1} parent=51 // pred_check_branch
          %358 = sbr.rel (%p356) target = $region56
        $region55: #{tpu_custom_call.1} parent=51 // pred_region
          %359 = dma.done %s352, 256
        $region56: #{tpu_custom_call.1} parent=51 // pred_fallthru
          _
        // Predicated region
        $region57: #{tpu_custom_call.1} parent=51 // pred_check
          %p360 = pneg %p121
        $region58: #{tpu_custom_call.1} parent=51 // pred_check_branch
          %362 = sbr.rel (%p360) target = $region60
        $region59: #{tpu_custom_call.1} parent=51 // pred_region
          %363 = dma.done [#allocation6], 256
        $region60: #{tpu_custom_call.1} parent=51 // pred_fallthru
          _
        // Predicated region
        $region61: #{tpu_custom_call.1} parent=51 // pred_check
          %p364 = pneg %p142
        $region62: #{tpu_custom_call.1} parent=51 // pred_check_branch
          %366 = sbr.rel (%p364) target = $region64
        $region63: #{tpu_custom_call.1} parent=51 // pred_region
          %367 = dma.done [#allocation6], 512
        $region64: #{tpu_custom_call.1} parent=51 // pred_fallthru
          _
        // Predicated region
        $region65: #{tpu_custom_call.1} parent=51 // pred_check
          %p368 = pneg %p163
        $region66: #{tpu_custom_call.1} parent=51 // pred_check_branch
          %370 = sbr.rel (%p368) target = $region68
        $region67: #{tpu_custom_call.1} parent=51 // pred_region
          %371 = dma.done [#allocation9], 512
        $region68: #{tpu_custom_call.1} parent=51 // pred_fallthru
          _
        // Predicated region
        $region69: #{tpu_custom_call.1} parent=51 // pred_check
          %p372 = pneg %p184
        $region70: #{tpu_custom_call.1} parent=51 // pred_check_branch
          %374 = sbr.rel (%p372) target = $region72
        $region71: #{tpu_custom_call.1} parent=51 // pred_region
          %375 = dma.done [#allocation9], 2048
        $region72: #{tpu_custom_call.1} parent=51 // pred_fallthru
          _
        %s376 = smul.u32 2, %s27
        %p377 = scmp.lt.s32.totalorder %s376, 3
        %s378 = scalar_select %p377, %s376, 3
        %s379 = smul.addr %s378, 8
        %s380 = scalar_lea.vmem %s0, %s379
        %p381 = pneg %p48
        %p382 = pneg %p45
        %s383 = sand.u32 %s61, 1
        %s384 = scalar_lea.sflag [#allocation3], %s383
        %s385 = sand.u32 %s61, 1
        %s386 = smul.addr %s385, 16
        %s387 = scalar_lea.vmem [#allocation2], %s386
        %p388 = pneg %p74
        %p389 = pneg %p71
        %s390 = smul.u32 2, %s27
        %p391 = scmp.lt.s32.totalorder %s390, 3
        %s392 = scalar_select %p391, %s390, 3
        %s393 = smul.addr %s392, 8
        %s394 = scalar_lea.vmem %s2, %s393
        %p395 = pneg %p100
        %p396 = pneg %p97
        %p397 = pneg %p121
        %p398 = pneg %p118
        %p399 = pneg %p142
        %p400 = pneg %p139
        %p401 = pneg %p163
        %p402 = pneg %p160
        %p403 = pneg %p184
        %p404 = pneg %p181
        %p405 = pneg %p205
        %p406 = pneg %p202
        %p407 = pneg %p231
        %p408 = pneg %p228
        %s409 = sand.u32 %s218, 1
        %s410 = scalar_lea.sflag [#allocation4], %s409
        %s411 = sand.u32 %s218, 1
        %s412 = smul.addr %s411, 16
        %s413 = scalar_lea.vmem [#allocation11], %s412
        %s414 = smul.u32 2, %s27
        %p415 = scmp.lt.s32.totalorder %s414, 3
        %s416 = scalar_select %p415, %s414, 3
        %s417 = smul.addr %s416, 8
        %s418 = scalar_lea.vmem %s0, %s417
        %s419 = smul.u32 2, %s27
        %s420 = smul.u32 2, %s27
        %s421 = smul.u32 2, %s27
        %p422 = scmp.lt.s32.totalorder %s421, 3
        %s423 = scalar_select %p422, %s421, 3
        %s424 = smul.addr %s423, 8
        %s425 = scalar_lea.vmem %s2, %s424
        %s426 = smul.u32 2, %s27
        %s427 = smul.u32 2, %s27
        %v428 = vld [vmem:[%s418] sm:$0xff]
        %v429 = vld [vmem:[%s418 + $0x8] sm:$0xff]
        %v430 = vld [vmem:[#allocation7] sm:$0xff]
        %v431 = vld [vmem:[#allocation7 + $0x8] sm:$0xff]
        %v432 = vld [vmem:[#allocation7 + $0x10] sm:$0xff]
        %v433 = vld [vmem:[#allocation7 + $0x18] sm:$0xff]
        %v434 = vld [vmem:[%s355] sm:$0xff]
        %v435 = vld [vmem:[%s355 + $0x8] sm:$0xff]
        %v436 = vld [vmem:[#allocation8] sm:$0xff]
        %v437 = vld [vmem:[#allocation8 + $0x8] sm:$0xff]
        %v438 = vld [vmem:[#allocation8 + $0x10] sm:$0xff]
        %v439 = vld [vmem:[#allocation8 + $0x18] sm:$0xff]
        %vm440 = vcmask 261120
        %v442 = vsel %vm440, %v434, 0
        %v445 = vsel %vm440, %v435, 0
        %447 = vmatprep.subr.mxu0 0.0
        %448 = vmatpush1.msra.mxu0 0.0
        %449 = vmatprep.subr.mxu0 0.0
        %450 = vmatpush1.msra.mxu0 0.0
        %451 = vmatprep.subr.mxu0 0.0
        %452 = vmatpush1.msra.mxu0 0.0
        %453 = vmatprep.subr.mxu0 0.0
        %454 = vmatpush1.msra.mxu0 0.0
        %455 = vmatprep.subr.mxu0 0.0
        %456 = vmatpush1.msra.mxu0 0.0
        %457 = vmatprep.subr.mxu0 0.0
        %458 = vmatpush1.msra.mxu0 0.0
        %459 = vmatprep.subr.mxu0 0.0
        %460 = vmatpush1.msra.mxu0 0.0
        %461 = vmatprep.subr.mxu0 0.0
        %462 = vmatpush1.msra.mxu0 0.0
        %463 = vmatprep.subr.mxu0 0.0
        %464 = vmatpush1.msra.mxu0 0.0
        %465 = vmatprep.subr.mxu0 0.0
        %466 = vmatpush1.msra.mxu0 0.0
        %467 = vmatprep.subr.mxu0 0.0
        %468 = vmatpush1.msra.mxu0 0.0
        %469 = vmatprep.subr.mxu0 0.0
        %470 = vmatpush1.msra.mxu0 0.0
        %471 = vmatprep.subr.mxu0 0.0
        %472 = vmatpush1.msra.mxu0 %v439
        %473 = vmatprep.subr.mxu0 0.0
        %474 = vmatpush1.msra.mxu0 %v438
        %475 = vmatprep.subr.mxu0 0.0
        %476 = vmatpush1.msra.mxu0 %v437
        %477 = vmatprep.subr.mxu0 0.0
        %478 = vmatpush1.msra.mxu0 %v436
        %479 = vmatprep.subr.mxu0 0.0
        %480 = vmatpush2.msra.mxu0 0.0
        %481 = vmatprep.subr.mxu0 0.0
        %482 = vmatpush2.msra.mxu0 0.0
        %483 = vmatprep.subr.mxu0 0.0
        %484 = vmatpush2.msra.mxu0 0.0
        %485 = vmatprep.subr.mxu0 0.0
        %486 = vmatpush2.msra.mxu0 0.0
        %487 = vmatprep.subr.mxu0 0.0
        %488 = vmatpush2.msra.mxu0 0.0
        %489 = vmatprep.subr.mxu0 0.0
        %490 = vmatpush2.msra.mxu0 0.0
        %491 = vmatprep.subr.mxu0 0.0
        %492 = vmatpush2.msra.mxu0 0.0
        %493 = vmatprep.subr.mxu0 0.0
        %494 = vmatpush2.msra.mxu0 0.0
        %495 = vmatprep.subr.mxu0 0.0
        %496 = vmatpush2.msra.mxu0 0.0
        %497 = vmatprep.subr.mxu0 0.0
        %498 = vmatpush2.msra.mxu0 0.0
        %499 = vmatprep.subr.mxu0 0.0
        %500 = vmatpush2.msra.mxu0 0.0
        %501 = vmatprep.subr.mxu0 0.0
        %502 = vmatpush2.msra.mxu0 0.0
        %503 = vmatprep.subr.mxu0 0.0
        %504 = vmatpush2.msra.mxu0 0.0
        %505 = vmatprep.subr.mxu0 0.0
        %506 = vmatpush2.msra.mxu0 0.0
        %507 = vmatprep.subr.mxu0 0.0
        %508 = vmatpush2.msra.mxu0 0.0
        %509 = vmatprep.subr.mxu0 0.0
        %510 = vmatpush2.msra.mxu0 0.0
        %511 = vmatprep.mubr.f32.mxu0 0.0
        %512 = vmatmul.mubr.f32.gmra.mxu0 %v442
        %v513 = vpop.f32.mrf.mxu0
        %v514 = vadd.f32 0.0, %v513
        %v515 = vpop.f32.mrf.mxu0
        %516 = vmatprep.mubr.f32.mxu0 0.0
        %517 = vmatmul.mubr.f32.gmra.mxu0 %v445
        %v518 = vpop.f32.mrf.mxu0
        %v519 = vadd.f32 0.0, %v518
        %v520 = vpop.f32.mrf.mxu0
        %521 = vdwg.mxu0
        %v523 = vsel %vm440, %v428, 0
        %v526 = vsel %vm440, %v429, 0
        %528 = vmatprep.subr.mxu0 0.0
        %529 = vmatpush1.msra.mxu0 0.0
        %530 = vmatprep.subr.mxu0 0.0
        %531 = vmatpush1.msra.mxu0 0.0
        %532 = vmatprep.subr.mxu0 0.0
        %533 = vmatpush1.msra.mxu0 0.0
        %534 = vmatprep.subr.mxu0 0.0
        %535 = vmatpush1.msra.mxu0 0.0
        %536 = vmatprep.subr.mxu0 0.0
        %537 = vmatpush1.msra.mxu0 0.0
        %538 = vmatprep.subr.mxu0 0.0
        %539 = vmatpush1.msra.mxu0 0.0
        %540 = vmatprep.subr.mxu0 0.0
        %541 = vmatpush1.msra.mxu0 0.0
        %542 = vmatprep.subr.mxu0 0.0
        %543 = vmatpush1.msra.mxu0 0.0
        %544 = vmatprep.subr.mxu0 0.0
        %545 = vmatpush1.msra.mxu0 0.0
        %546 = vmatprep.subr.mxu0 0.0
        %547 = vmatpush1.msra.mxu0 0.0
        %548 = vmatprep.subr.mxu0 0.0
        %549 = vmatpush1.msra.mxu0 0.0
        %550 = vmatprep.subr.mxu0 0.0
        %551 = vmatpush1.msra.mxu0 0.0
        %552 = vmatprep.subr.mxu0 0.0
        %553 = vmatpush1.msra.mxu0 %v433
        %554 = vmatprep.subr.mxu0 0.0
        %555 = vmatpush1.msra.mxu0 %v432
        %556 = vmatprep.subr.mxu0 0.0
        %557 = vmatpush1.msra.mxu0 %v431
        %558 = vmatprep.subr.mxu0 0.0
        %559 = vmatpush1.msra.mxu0 %v430
        %560 = vmatprep.subr.mxu0 0.0
        %561 = vmatpush2.msra.mxu0 0.0
        %562 = vmatprep.subr.mxu0 0.0
        %563 = vmatpush2.msra.mxu0 0.0
        %564 = vmatprep.subr.mxu0 0.0
        %565 = vmatpush2.msra.mxu0 0.0
        %566 = vmatprep.subr.mxu0 0.0
        %567 = vmatpush2.msra.mxu0 0.0
        %568 = vmatprep.subr.mxu0 0.0
        %569 = vmatpush2.msra.mxu0 0.0
        %570 = vmatprep.subr.mxu0 0.0
        %571 = vmatpush2.msra.mxu0 0.0
        %572 = vmatprep.subr.mxu0 0.0
        %573 = vmatpush2.msra.mxu0 0.0
        %574 = vmatprep.subr.mxu0 0.0
        %575 = vmatpush2.msra.mxu0 0.0
        %576 = vmatprep.subr.mxu0 0.0
        %577 = vmatpush2.msra.mxu0 0.0
        %578 = vmatprep.subr.mxu0 0.0
        %579 = vmatpush2.msra.mxu0 0.0
        %580 = vmatprep.subr.mxu0 0.0
        %581 = vmatpush2.msra.mxu0 0.0
        %582 = vmatprep.subr.mxu0 0.0
        %583 = vmatpush2.msra.mxu0 0.0
        %584 = vmatprep.subr.mxu0 0.0
        %585 = vmatpush2.msra.mxu0 0.0
        %586 = vmatprep.subr.mxu0 0.0
        %587 = vmatpush2.msra.mxu0 0.0
        %588 = vmatprep.subr.mxu0 0.0
        %589 = vmatpush2.msra.mxu0 0.0
        %590 = vmatprep.subr.mxu0 0.0
        %591 = vmatpush2.msra.mxu0 0.0
        %592 = vmatprep.mubr.f32.mxu0 0.0
        %593 = vmatmul.mubr.f32.gmra.mxu0 %v523
        %v594 = vpop.f32.mrf.mxu0
        %v595 = vadd.f32 %v514, %v594
        %v596 = vpop.f32.mrf.mxu0
        %597 = vmatprep.mubr.f32.mxu0 0.0
        %598 = vmatmul.mubr.f32.gmra.mxu0 %v526
        %v599 = vpop.f32.mrf.mxu0
        %v600 = vadd.f32 %v519, %v599
        %v601 = vpop.f32.mrf.mxu0
        %602 = vdwg.mxu0
        %v603 = vld [vmem:[%s7] sm:$0x1]
        %v604 = vlaneseq
        %v605 = vshrl.u32 %v604, 7
        %v606 = vsub.s32 0, %v605
        %v607 = vrot.slane %v603, %v606
        %v608 = vadd.f32 %v595, %v607
        %v609 = vadd.f32 %v600, %v607
        %v610 = vmul.f32 %v608, 0.5
        %v611 = vmul.f32 %v609, 0.5
        %v612 = vmul.f32 %v608, 0.70710677
        %v613 = vmul.f32 %v609, 0.70710677
        %v614 = verf.f32.pop %v612
        %v615 = verf.f32.pop %v613
        %v616 = vadd.f32 %v614, 1.0
        %v617 = vadd.f32 %v615, 1.0
        %v618 = vmul.f32 %v610, %v616
        %v619 = vmul.f32 %v611, %v617
        %v620 = vld [vmem:[#allocation10] sm:$0xff]
        %v621 = vld [vmem:[#allocation10 + $0x8] sm:$0xff]
        %v622 = vld [vmem:[#allocation10 + $0x10] sm:$0xff]
        %v623 = vld [vmem:[#allocation10 + $0x18] sm:$0xff]
        %v624 = vld [vmem:[#allocation10 + $0x20] sm:$0xff]
        %v625 = vld [vmem:[#allocation10 + $0x28] sm:$0xff]
        %v626 = vld [vmem:[#allocation10 + $0x30] sm:$0xff]
        %v627 = vld [vmem:[#allocation10 + $0x38] sm:$0xff]
        %v628 = vld [vmem:[#allocation10 + $0x40] sm:$0xff]
        %v629 = vld [vmem:[#allocation10 + $0x48] sm:$0xff]
        %v630 = vld [vmem:[#allocation10 + $0x50] sm:$0xff]
        %v631 = vld [vmem:[#allocation10 + $0x58] sm:$0xff]
        %v632 = vld [vmem:[#allocation10 + $0x60] sm:$0xff]
        %v633 = vld [vmem:[#allocation10 + $0x68] sm:$0xff]
        %v634 = vld [vmem:[#allocation10 + $0x70] sm:$0xff]
        %v635 = vld [vmem:[#allocation10 + $0x78] sm:$0xff]
        %v636 = vld [vmem:[%s7 + $0x1] sm:$0x1]
        %v637 = vlaneseq
        %v638 = vshrl.u32 %v637, 7
        %v639 = vsub.s32 0, %v638
        %v640 = vrot.slane %v636, %v639
        %641 = vmatprep.subr.mxu0 0.0
        %642 = vmatpush1.msra.mxu0 %v635
        %643 = vmatprep.subr.mxu0 0.0
        %644 = vmatpush1.msra.mxu0 %v634
        %645 = vmatprep.subr.mxu0 0.0
        %646 = vmatpush1.msra.mxu0 %v633
        %647 = vmatprep.subr.mxu0 0.0
        %648 = vmatpush1.msra.mxu0 %v632
        %649 = vmatprep.subr.mxu0 0.0
        %650 = vmatpush1.msra.mxu0 %v631
        %651 = vmatprep.subr.mxu0 0.0
        %652 = vmatpush1.msra.mxu0 %v630
        %653 = vmatprep.subr.mxu0 0.0
        %654 = vmatpush1.msra.mxu0 %v629
        %655 = vmatprep.subr.mxu0 0.0
        %656 = vmatpush1.msra.mxu0 %v628
        %657 = vmatprep.subr.mxu0 0.0
        %658 = vmatpush1.msra.mxu0 %v627
        %659 = vmatprep.subr.mxu0 0.0
        %660 = vmatpush1.msra.mxu0 %v626
        %661 = vmatprep.subr.mxu0 0.0
        %662 = vmatpush1.msra.mxu0 %v625
        %663 = vmatprep.subr.mxu0 0.0
        %664 = vmatpush1.msra.mxu0 %v624
        %665 = vmatprep.subr.mxu0 0.0
        %666 = vmatpush1.msra.mxu0 %v623
        %667 = vmatprep.subr.mxu0 0.0
        %668 = vmatpush1.msra.mxu0 %v622
        %669 = vmatprep.subr.mxu0 0.0
        %670 = vmatpush1.msra.mxu0 %v621
        %671 = vmatprep.subr.mxu0 0.0
        %672 = vmatpush1.msra.mxu0 %v620
        %673 = vmatprep.subr.mxu0 0.0
        %674 = vmatpush2.msra.mxu0 0.0
        %675 = vmatprep.subr.mxu0 0.0
        %676 = vmatpush2.msra.mxu0 0.0
        %677 = vmatprep.subr.mxu0 0.0
        %678 = vmatpush2.msra.mxu0 0.0
        %679 = vmatprep.subr.mxu0 0.0
        %680 = vmatpush2.msra.mxu0 0.0
        %681 = vmatprep.subr.mxu0 0.0
        %682 = vmatpush2.msra.mxu0 0.0
        %683 = vmatprep.subr.mxu0 0.0
        %684 = vmatpush2.msra.mxu0 0.0
        %685 = vmatprep.subr.mxu0 0.0
        %686 = vmatpush2.msra.mxu0 0.0
        %687 = vmatprep.subr.mxu0 0.0
        %688 = vmatpush2.msra.mxu0 0.0
        %689 = vmatprep.subr.mxu0 0.0
        %690 = vmatpush2.msra.mxu0 0.0
        %691 = vmatprep.subr.mxu0 0.0
        %692 = vmatpush2.msra.mxu0 0.0
        %693 = vmatprep.subr.mxu0 0.0
        %694 = vmatpush2.msra.mxu0 0.0
        %695 = vmatprep.subr.mxu0 0.0
        %696 = vmatpush2.msra.mxu0 0.0
        %697 = vmatprep.subr.mxu0 0.0
        %698 = vmatpush2.msra.mxu0 0.0
        %699 = vmatprep.subr.mxu0 0.0
        %700 = vmatpush2.msra.mxu0 0.0
        %701 = vmatprep.subr.mxu0 0.0
        %702 = vmatpush2.msra.mxu0 0.0
        %703 = vmatprep.subr.mxu0 0.0
        %704 = vmatpush2.msra.mxu0 0.0
        %705 = vmatprep.mubr.f32.mxu0 0.0
        %706 = vmatmul.mubr.f32.gmra.mxu0 %v618
        %v707 = vpop.f32.mrf.mxu0
        %v708 = vadd.f32 %v640, %v707
        %v709 = vpop.f32.mrf.mxu0
        %710 = vmatprep.mubr.f32.mxu0 0.0
        %711 = vmatmul.mubr.f32.gmra.mxu0 %v619
        %v712 = vpop.f32.mrf.mxu0
        %v713 = vadd.f32 %v640, %v712
        %v714 = vpop.f32.mrf.mxu0
        %715 = vdwg.mxu0
        %v716 = vld [vmem:[%s425] sm:$0xff]
        %v717 = vld [vmem:[%s425 + $0x8] sm:$0xff]
        %v718 = vlaneseq
        %v719 = vand.u32 %v718, 127
        %720 = vset.pattern.permute.xlu0 0
        %721 = vperm.xlu0 %720, %v716
        %v722 = vpop.permute.xlu0 %721
        %723 = vset.pattern.permute.xlu0 0
        %724 = vperm.xlu0 %723, %v717
        %v725 = vpop.permute.xlu0 %724
        %vm726 = vcmp.eq.s32.totalorder %v722, %v719
        %vm727 = vcmp.eq.s32.totalorder %v725, %v719
        %v728 = vsel %vm726, 1, 0
        %v729 = vsel %vm727, 1, 0
        %v730 = vcvt.s32.f32 %v728
        %v731 = vcvt.s32.f32 %v729
        %v732 = vld [vmem:[#allocation5] sm:$0xff]
        %v733 = vld [vmem:[#allocation5 + $0x8] sm:$0xff]
        %vm734 = vcmask 130048
        %v736 = vsel %vm734, %v730, 0
        %v739 = vsel %vm734, %v731, 0
        %741 = vmatprep.subr.mxu0 0.0
        %742 = vmatpush1.msra.mxu0 0.0
        %743 = vmatprep.subr.mxu0 0.0
        %744 = vmatpush1.msra.mxu0 0.0
        %745 = vmatprep.subr.mxu0 0.0
        %746 = vmatpush1.msra.mxu0 0.0
        %747 = vmatprep.subr.mxu0 0.0
        %748 = vmatpush1.msra.mxu0 0.0
        %749 = vmatprep.subr.mxu0 0.0
        %750 = vmatpush1.msra.mxu0 0.0
        %751 = vmatprep.subr.mxu0 0.0
        %752 = vmatpush1.msra.mxu0 0.0
        %753 = vmatprep.subr.mxu0 0.0
        %754 = vmatpush1.msra.mxu0 0.0
        %755 = vmatprep.subr.mxu0 0.0
        %756 = vmatpush1.msra.mxu0 0.0
        %757 = vmatprep.subr.mxu0 0.0
        %758 = vmatpush1.msra.mxu0 0.0
        %759 = vmatprep.subr.mxu0 0.0
        %760 = vmatpush1.msra.mxu0 0.0
        %761 = vmatprep.subr.mxu0 0.0
        %762 = vmatpush1.msra.mxu0 0.0
        %763 = vmatprep.subr.mxu0 0.0
        %764 = vmatpush1.msra.mxu0 0.0
        %765 = vmatprep.subr.mxu0 0.0
        %766 = vmatpush1.msra.mxu0 0.0
        %767 = vmatprep.subr.mxu0 0.0
        %768 = vmatpush1.msra.mxu0 0.0
        %769 = vmatprep.subr.mxu0 0.0
        %770 = vmatpush1.msra.mxu0 %v733
        %771 = vmatprep.subr.mxu0 0.0
        %772 = vmatpush1.msra.mxu0 %v732
        %773 = vmatprep.subr.mxu0 0.0
        %774 = vmatpush2.msra.mxu0 0.0
        %775 = vmatprep.subr.mxu0 0.0
        %776 = vmatpush2.msra.mxu0 0.0
        %777 = vmatprep.subr.mxu0 0.0
        %778 = vmatpush2.msra.mxu0 0.0
        %779 = vmatprep.subr.mxu0 0.0
        %780 = vmatpush2.msra.mxu0 0.0
        %781 = vmatprep.subr.mxu0 0.0
        %782 = vmatpush2.msra.mxu0 0.0
        %783 = vmatprep.subr.mxu0 0.0
        %784 = vmatpush2.msra.mxu0 0.0
        %785 = vmatprep.subr.mxu0 0.0
        %786 = vmatpush2.msra.mxu0 0.0
        %787 = vmatprep.subr.mxu0 0.0
        %788 = vmatpush2.msra.mxu0 0.0
        %789 = vmatprep.subr.mxu0 0.0
        %790 = vmatpush2.msra.mxu0 0.0
        %791 = vmatprep.subr.mxu0 0.0
        %792 = vmatpush2.msra.mxu0 0.0
        %793 = vmatprep.subr.mxu0 0.0
        %794 = vmatpush2.msra.mxu0 0.0
        %795 = vmatprep.subr.mxu0 0.0
        %796 = vmatpush2.msra.mxu0 0.0
        %797 = vmatprep.subr.mxu0 0.0
        %798 = vmatpush2.msra.mxu0 0.0
        %799 = vmatprep.subr.mxu0 0.0
        %800 = vmatpush2.msra.mxu0 0.0
        %801 = vmatprep.subr.mxu0 0.0
        %802 = vmatpush2.msra.mxu0 0.0
        %803 = vmatprep.subr.mxu0 0.0
        %804 = vmatpush2.msra.mxu0 0.0
        %805 = vmatprep.mubr.f32.mxu0 0.0
        %806 = vmatmul.mubr.f32.gmra.mxu0 %v736
        %v807 = vpop.f32.mrf.mxu0
        %v808 = vadd.f32 0.0, %v807
        %v809 = vpop.f32.mrf.mxu0
        %810 = vmatprep.mubr.f32.mxu0 0.0
        %811 = vmatmul.mubr.f32.gmra.mxu0 %v739
        %v812 = vpop.f32.mrf.mxu0
        %v813 = vadd.f32 0.0, %v812
        %v814 = vpop.f32.mrf.mxu0
        %815 = vdwg.mxu0
        %vm816 = vcmp.lt.s32.totalorder %v716, 0
        %vm817 = vcmp.lt.s32.totalorder %v717, 0
        %v818 = vsel %vm816, 1, 0
        %v819 = vsel %vm817, 1, 0
        %820 = vset.pattern.permute.xlu0 0
        %821 = vperm.xlu0 %820, %v818
        %v822 = vpop.permute.xlu0 %821
        %823 = vset.pattern.permute.xlu0 0
        %824 = vperm.xlu0 %823, %v819
        %v825 = vpop.permute.xlu0 %824
        %vm826 = vcmp.eq.s32.totalorder %v822, 1
        %vm827 = vcmp.eq.s32.totalorder %v825, 1
        %v828 = vsel %vm826, %v708, %v808
        %v829 = vsel %vm827, %v713, %v813
        %830 = vst [vmem:[%s413] sm:$0xff] %v828
        %831 = vst [vmem:[%s413 + $0x8] sm:$0xff] %v829
        %s832 = sand.u32 %s218, 1
        %s833 = scalar_lea.sflag [#allocation4], %s832
        %s834 = sand.u32 %s218, 1
        %s835 = smul.addr %s834, 16
        %s836 = scalar_lea.vmem [#allocation11], %s835
        // Predicated region
        $region73: #{tpu_custom_call.1} parent=51 // pred_check
          %p837 = pneg %p228
        $region74: #{tpu_custom_call.1} parent=51 // pred_check_branch
          %839 = sbr.rel (%p837) target = $region76
        $region75: #{tpu_custom_call.1} parent=51 // pred_region
          %s840 = smul.u32 2, %s27
          %s842 = ssub.s32 256, 256
          %843 = vsyncadd %s833, %s842
          %s844 = smul.addr %s840, 128
          %s845 = scalar_lea.hbm %s8, %s844
          %s846 = sshll.u32 %s836, 4
          %s847 = int_to_ptr.vmem [resolvable:$true] %s846
          %852 = dma.vmem_to_hbm [thread:$0]  %s847, 256, %s845, %s833, 128, 128, 8
        $region76: #{tpu_custom_call.1} parent=51 // pred_fallthru
          _
      $region52: #{tpu_custom_call.1} parent=5 // pred_fallthru
        _
      %p853 = scmp.le.s32.totalorder 2, %s22
      // Predicated region
      $region77: #{tpu_custom_call.1} parent=5 // pred_check
        %p854 = pneg %p853
      $region78: #{tpu_custom_call.1} parent=5 // pred_check_branch
        %856 = sbr.rel (%p854) target = $region80
      $region79: #{tpu_custom_call.1} parent=5 // pred_region
        %s857 = ssub.s32 %s22, 2
        // Predicated region
        $region81: #{tpu_custom_call.1} parent=79 // pred_check
          %p858 = pneg %p234
        $region82: #{tpu_custom_call.1} parent=79 // pred_check_branch
          %860 = sbr.rel (%p858) target = $region84
        $region83: #{tpu_custom_call.1} parent=79 // pred_region
          %s861 = sand.u32 %s219, 1
          %s862 = scalar_lea.sflag [#allocation4], %s861
          %s863 = sand.u32 %s219, 1
          %s864 = smul.addr %s863, 16
          %s865 = scalar_lea.vmem [#allocation11], %s864
          %866 = dma.done %s862, 256
        $region84: #{tpu_custom_call.1} parent=79 // pred_fallthru
          _
      $region80: #{tpu_custom_call.1} parent=5 // pred_fallthru
        _
    $region6: #{tpu_custom_call.1} parent=1 // loop_footer
      %s26 = sadd.s32 1, %s22
    $region7: #{tpu_custom_call.1} parent=1 // loop_footer_branch
      %21 = sbr.rel target = $region3
    $region8: #{tpu_custom_call.1} parent=1 // loop_exit
      _
    %867 = vsyncpa [#allocation3], 1
    %s868 = scalar_lea.sflag [#allocation3], 1
    %869 = vsyncpa %s868, 1
    %870 = vsyncpa [#allocation6], 1
    %871 = vsyncpa [#allocation9], 1
    %872 = vsyncpa [#allocation4], 1
    %s873 = scalar_lea.sflag [#allocation4], 1
    %874 = vsyncpa %s873, 1

</llo_original>
